<compile_context>
chip_gen: v5e
topology: v5e:2x2
jax: 0.10.0
libtpu: 0.0.40
codegen_flags: <defaults>
</compile_context>

<pallas_src>
import jax
import jax.numpy as jnp
from jax.experimental import pallas as pl
from jax.experimental.pallas import tpu as pltpu


def _upsample_matmul_kernel(x_ref, m_ref, o_ref):
    # x_ref: (TR, G*W)   m_ref: (G*W, G*s*s*W)   o_ref: (TR, G*s*s*W)
    o_ref[...] = jnp.dot(
        x_ref[...], m_ref[...], preferred_element_type=jnp.float32
    ).astype(o_ref.dtype)


def _pick_row_group(H, W, s, dsize):
    """Smallest divisor G of H giving a lane-dense (>=128) output last dim,
    with the replication matrix kept small enough to sit in VMEM."""
    divisors = [d for d in range(1, H + 1) if H % d == 0]
    for g in divisors:
        if g * s * s * W >= 128 and (g * W) * (g * s * s * W) * dsize <= (2 << 20):
            return g
    for g in reversed(divisors):
        if (g * W) * (g * s * s * W) * dsize <= (2 << 20):
            return g
    return 1


def _pick_row_tile(rows_total, cap):
    """Largest divisor of rows_total that is <= cap and a multiple of 8
    (sublane rule); fall back to a single full-extent block."""
    cap = min(cap, max(8, rows_total // 2))  # keep >= 2 grid steps when possible
    if cap >= rows_total:
        return rows_total
    for d in range(int(cap), 7, -1):
        if rows_total % d == 0 and d % 8 == 0:
            return d
    return rows_total


def upsample_nearest(x, scale_factor):
    """Nearest-neighbor upsampling of an NCHW tensor by an integer scale factor."""
    s = int(scale_factor)
    assert s == scale_factor and s >= 1, "integer scale_factor required"
    N, C, H, W = x.shape
    H_out, W_out = H * s, W * s
    if s == 1:
        return x

    assert jnp.issubdtype(x.dtype, jnp.floating), "floating dtypes only"
    # bf16 stays bf16 (exact: each output element is 1.0 * one input element);
    # other float dtypes run the matmul in f32.
    mat_dtype = x.dtype if x.dtype in (jnp.bfloat16, jnp.float32) else jnp.float32
    dsize = jnp.dtype(mat_dtype).itemsize

    G = _pick_row_group(H, W, s, dsize)
    K = G * W                  # contraction dim
    Lout = G * s * s * W       # lane-dense output last dim
    rows_total = N * C * (H // G)

    # 0/1 replication matrix:
    #   M[j*W + wi, t*W_out + wo] = 1  iff  j == t // s  and  wi == wo // s
    rin = jnp.arange(K)
    cout = jnp.arange(Lout)
    j, wi = rin // W, rin % W
    t, wo = cout // W_out, cout % W_out
    M = (((t // s)[None, :] == j[:, None]) &
         ((wo // s)[None, :] == wi[:, None])).astype(mat_dtype)

    x2 = x.reshape(rows_total, K).astype(mat_dtype)  # free, contiguous reshape

    # VMEM budget: 2x double-buffered (in + out) blocks + 2x resident M,
    # kept under the most conservative scoped-VMEM default (v5e: 16 MiB).
    m_bytes = K * Lout * dsize
    row_bytes = (K + Lout) * dsize
    budget = max(1 << 20, ((13 << 20) - 2 * m_bytes) // 2)
    TR = _pick_row_tile(rows_total, max(8, budget // row_bytes))
    grid = (rows_total // TR,)

    out2 = pl.pallas_call(
        _upsample_matmul_kernel,
        out_shape=jax.ShapeDtypeStruct((rows_total, Lout), x.dtype),
        grid_spec=pltpu.PrefetchScalarGridSpec(
            num_scalar_prefetch=0,
            grid=grid,
            in_specs=[
                pl.BlockSpec((TR, K), lambda i: (i, 0)),
                pl.BlockSpec((K, Lout), lambda i: (0, 0)),  # VMEM-resident
            ],
            out_specs=pl.BlockSpec((TR, Lout), lambda i: (i, 0)),
        ),
        compiler_params=pltpu.CompilerParams(
            dimension_semantics=("parallel",),
        ),
        cost_estimate=pl.CostEstimate(
            flops=2 * rows_total * K * Lout,
            transcendentals=0,
            bytes_accessed=(rows_total * K + K * Lout + rows_total * Lout) * dsize,
        ),
    )(x2, M)

    # Free, contiguous reshape back to NCHW.
    return out2.reshape(N, C, H_out, W_out)


class Upsample:
    """Pallas equivalent of the PyTorch YOLOv3 Upsample module (nearest mode)."""

    def __init__(self, scale_factor, mode: str = "nearest"):
        assert mode == "nearest", "only nearest mode is implemented"
        self.scale_factor = scale_factor
        self.mode = mode

    def __call__(self, x):
        return upsample_nearest(x, self.scale_factor)


if __name__ == "__main__":
    key = jax.random.PRNGKey(0)
    N, C, H, W = 2, 4, 16, 16
    scale = 2  # YOLOv3 uses scale_factor=2, mode="nearest"

    x = jax.random.normal(key, (N, C, H, W), dtype=jnp.float32)

    model = Upsample(scale_factor=scale, mode="nearest")
    y = jax.block_until_ready(model(x))

    # Reference: nearest upsample with integer scale == repeat along H and W.
    ref = jnp.repeat(jnp.repeat(x, scale, axis=2), scale, axis=3)

    assert y.shape == (N, C, H * scale, W * scale), y.shape
    assert y.dtype == x.dtype, y.dtype
    assert jnp.allclose(y, ref, atol=1e-5, rtol=1e-5), "mismatch vs reference"

    print("KERNEL_OK")
</pallas_src>

<mosaic_0001>
module attributes {stable_mosaic.version = 11 : i64} {
  func.func @_upsample_matmul_kernel(%arg0: i32, %arg1: memref<32x32xf32, #tpu.memory_space<vmem>>, %arg2: memref<32x128xf32, #tpu.memory_space<vmem>>, %arg3: memref<32x128xf32, #tpu.memory_space<vmem>>) attributes {dimension_semantics = [#tpu.dimension_semantics<parallel>], iteration_bounds = array<i64: 2>, scalar_prefetch = 0 : i64, scratch_operands = 0 : i64, tpu.core_type = #tpu.core_type<tc>, window_params = [{transform_indices = @transform_0, window_bounds = array<i64: 32, 32>}, {pipeline_mode = #tpu.pipeline_mode<synchronous>, transform_indices = @transform_1, window_bounds = array<i64: 32, 128>}, {transform_indices = @transform_2, window_bounds = array<i64: 32, 128>}]} {
    %c0 = arith.constant 0 : index
    %c0_0 = arith.constant 0 : index
    %0 = vector.load %arg1[%c0, %c0_0] : memref<32x32xf32, #tpu.memory_space<vmem>>, vector<32x32xf32>
    %c0_1 = arith.constant 0 : index
    %c0_2 = arith.constant 0 : index
    %1 = vector.load %arg2[%c0_1, %c0_2] : memref<32x128xf32, #tpu.memory_space<vmem>>, vector<32x128xf32>
    %cst = arith.constant dense<0.000000e+00> : vector<32x128xf32>
    %2 = tpu.matmul %0, %1, %cst {dimension_numbers = #tpu.dot_dimension_numbers<[1], [0], [0], [1], [0, 0, 1, 1], [], []>} : vector<32x32xf32>, vector<32x128xf32>, vector<32x128xf32> -> vector<32x128xf32>
    %c0_3 = arith.constant 0 : index
    %c0_4 = arith.constant 0 : index
    %3 = vector.load %arg3[%c0_3, %c0_4] : memref<32x128xf32, #tpu.memory_space<vmem>>, vector<32x128xf32>
    tpu.vector_store %arg3[%c0_3, %c0_4], %2 {strides = array<i32>} : memref<32x128xf32, #tpu.memory_space<vmem>>, vector<32x128xf32>,
    return
  }
  func.func @transform_0(%arg0: i32) -> (i32, i32) {
    %c0_i32 = arith.constant 0 : i32
    %c0_i32_0 = arith.constant 0 : i32
    return %arg0, %c0_i32 : i32, i32
  }
  func.func @transform_1(%arg0: i32) -> (i32, i32) {
    %c0_i32 = arith.constant 0 : i32
    %c0_i32_0 = arith.constant 0 : i32
    %c0_i32_1 = arith.constant 0 : i32
    return %c0_i32, %c0_i32_0 : i32, i32
  }
  func.func @transform_2(%arg0: i32) -> (i32, i32) {
    %c0_i32 = arith.constant 0 : i32
    %c0_i32_0 = arith.constant 0 : i32
    return %arg0, %c0_i32 : i32, i32
  }
}

</mosaic_0001>

<llo_original>
// kernel: tpu_custom_call.1
$region0: #{tpu_custom_call.1}
  #allocation0 [shape = 'u32[]', space=smem, size = 0x4, offset = 0x4, fixed_abs, tag = 'smem constant byte address 0x4 - core index']
  #allocation1 [shape = 'u32[72,128]{1,0:T(1,128)}', space=vmem, size = 0x9000, scoped, tag = 'internal scratch']
  %s0 = inlined_call_operand.vmem [shape: f32[64,32], index: 0, kind: input, shape index: {}]
  %s1 = inlined_call_operand.vmem [shape: f32[32,128], index: 1, kind: input, shape index: {}]
  %s2 = inlined_call_operand.hbm [shape: f32[64,128], index: 2, kind: output, shape index: {}]
  %s3 = sld [smem:[#allocation0]]
  $region41: #{tpu_custom_call.1} parent=0
    _
  %s5 = ssub.s32 1, %s3
  %s6 = scalar_select 0, %s5, %s3
  $region1: #{tpu_custom_call.1} parent=0
    #allocation2 [shape = 'u8[32768]{0}', space=vmem, size = 0x8000, scoped, tag = 'output window, operand 0']
    #allocation3 [shape = 's32[2]{0}', space=sflag, size = 0x8, scoped, tag = 'scoped memory for tpu_custom_call.1']
    %7 = vsyncpa [#allocation3], 0
    %s8 = scalar_lea.sflag [#allocation3], 1
    %9 = vsyncpa %s8, 0
    loop: start=0, step=1, limit=4
    $region2: #{tpu_custom_call.1} parent=1 // loop_pre_header
      _
    $region3: #{tpu_custom_call.1} parent=1 // loop_header
      %s11 = sphi 0, %s15
      %p12 = scmp.ge.s32.totalorder %s11, 4
      %s21 = sphi 0, %s23
      %s24 = sphi 0, %s21
      %s25 = sphi 0, %s24
      %s41 = sphi 0, %s25
      %s45 = sphi 0, %s45
      %s47 = sphi 0, %s45
      %s48 = sphi 0, %s47
      %s62 = sphi 0, %s48
      %s68 = sphi 0, %s70
      %s71 = sphi 0, %s68
      %s72 = sphi 0, %s71
      %s88 = sphi 0, %s72
    $region4: #{tpu_custom_call.1} parent=1 // loop_header_branch
      %14 = sbr.rel (%p12) target = $region8
    $region5: #{tpu_custom_call.1} parent=1 // loop_body
      %s16 = ssub.s32 %s11, 1
      %s17 = ssub.s32 %s11, 2
      %s18 = sadd.s32 %s11, 1
      %s19 = ssub.s32 %s11, %s18
      %p20 = scmp.eq.s32.totalorder %s19, 0
      %s22 = sadd.s32 %s21, 1
      %s23 = scalar_select %p20, %s21, %s22
      %p26 = pneg %p20
      %p27 = scmp.eq.s32.totalorder %s11, 1
      %p28 = por %p26, %p27
      %p29 = scmp.ne.s32.totalorder %s21, %s24
      %p30 = scmp.eq.s32.totalorder %s11, 0
      %p31 = por %p29, %p30
      %p32 = scmp.ne.s32.totalorder %s21, %s24
      %p33 = scmp.eq.s32.totalorder %s16, 1
      %p34 = por %p32, %p33
      %p35 = scmp.ne.s32.totalorder %s24, %s25
      %p36 = scmp.eq.s32.totalorder %s16, 0
      %p37 = por %p35, %p36
      %p38 = scmp.ne.s32.totalorder %s24, %s25
      %p39 = scmp.eq.s32.totalorder %s17, 1
      %p40 = por %p38, %p39
      %p42 = scmp.ne.s32.totalorder %s25, %s41
      %p43 = scmp.eq.s32.totalorder %s17, 0
      %p44 = por %p42, %p43
      %s46 = sadd.s32 %s45, 1
      %p49 = scmp.eq.s32.totalorder %s11, 1
      %p50 = scmp.ne.s32.totalorder %s45, %s47
      %p51 = scmp.eq.s32.totalorder %s11, 0
      %p52 = por %p50, %p51
      %p53 = scmp.ne.s32.totalorder %s45, %s47
      %p54 = scmp.eq.s32.totalorder %s16, 1
      %p55 = por %p53, %p54
      %p56 = scmp.ne.s32.totalorder %s47, %s48
      %p57 = scmp.eq.s32.totalorder %s16, 0
      %p58 = por %p56, %p57
      %p59 = scmp.ne.s32.totalorder %s47, %s48
      %p60 = scmp.eq.s32.totalorder %s17, 1
      %p61 = por %p59, %p60
      %p63 = scmp.ne.s32.totalorder %s48, %s62
      %p64 = scmp.eq.s32.totalorder %s17, 0
      %p65 = por %p63, %p64
      %s66 = ssub.s32 %s11, %s18
      %p67 = scmp.eq.s32.totalorder %s66, 0
      %s69 = sadd.s32 %s68, 1
      %s70 = scalar_select %p67, %s68, %s69
      %p73 = pneg %p67
      %p74 = scmp.eq.s32.totalorder %s11, 1
      %p75 = por %p73, %p74
      %p76 = scmp.ne.s32.totalorder %s68, %s71
      %p77 = scmp.eq.s32.totalorder %s11, 0
      %p78 = por %p76, %p77
      %p79 = scmp.ne.s32.totalorder %s68, %s71
      %p80 = scmp.eq.s32.totalorder %s16, 1
      %p81 = por %p79, %p80
      %p82 = scmp.ne.s32.totalorder %s71, %s72
      %p83 = scmp.eq.s32.totalorder %s16, 0
      %p84 = por %p82, %p83
      %p85 = scmp.ne.s32.totalorder %s71, %s72
      %p86 = scmp.eq.s32.totalorder %s17, 1
      %p87 = por %p85, %p86
      %p89 = scmp.ne.s32.totalorder %s72, %s88
      %p90 = scmp.eq.s32.totalorder %s17, 0
      %p91 = por %p89, %p90
      %p92 = scmp.le.s32.totalorder 1, %s11
      %p93 = scmp.lt.s32.totalorder %s11, 3
      %p94 = pnand %p92, %p93
      %p95 = pneg %p94
      // Predicated region
      $region9: #{tpu_custom_call.1} parent=5 // pred_check
        _
      $region10: #{tpu_custom_call.1} parent=5 // pred_check_branch
        %97 = sbr.rel (%p94) target = $region12
      $region11: #{tpu_custom_call.1} parent=5 // pred_region
        %s98 = ssub.s32 %s11, 1
        // Predicated region
        $region13: #{tpu_custom_call.1} parent=11 // pred_check
          %p99 = pneg %p58
        $region14: #{tpu_custom_call.1} parent=11 // pred_check_branch
          %101 = sbr.rel (%p99) target = $region16
        $region15: #{tpu_custom_call.1} parent=11 // pred_region
          _
        $region16: #{tpu_custom_call.1} parent=11 // pred_fallthru
          _
      $region12: #{tpu_custom_call.1} parent=5 // pred_fallthru
        _
      %p102 = scmp.lt.s32.totalorder %s11, 2
      // Predicated region
      $region17: #{tpu_custom_call.1} parent=5 // pred_check
        %p103 = pneg %p102
      $region18: #{tpu_custom_call.1} parent=5 // pred_check_branch
        %105 = sbr.rel (%p103) target = $region20
      $region19: #{tpu_custom_call.1} parent=5 // pred_region
        // Predicated region
        $region21: #{tpu_custom_call.1} parent=19 // pred_check
          %p106 = pneg %p31
        $region22: #{tpu_custom_call.1} parent=19 // pred_check_branch
          %108 = sbr.rel (%p106) target = $region24
        $region23: #{tpu_custom_call.1} parent=19 // pred_region
          %s109 = smul.u32 4, %s11
          %p110 = scmp.lt.s32.totalorder %s109, 7
          %s111 = scalar_select %p110, %s109, 7
          %s112 = smul.addr %s111, 8
          %s113 = scalar_lea.vmem %s0, %s112
          %s114 = smul.u32 4, %s11
        $region24: #{tpu_custom_call.1} parent=19 // pred_fallthru
          _
      $region20: #{tpu_custom_call.1} parent=5 // pred_fallthru
        _
      %p115 = scmp.le.s32.totalorder 1, %s11
      %p116 = scmp.lt.s32.totalorder %s11, 3
      %p117 = pnand %p115, %p116
      %p118 = pneg %p117
      // Predicated region
      $region25: #{tpu_custom_call.1} parent=5 // pred_check
        _
      $region26: #{tpu_custom_call.1} parent=5 // pred_check_branch
        %120 = sbr.rel (%p117) target = $region28
      $region27: #{tpu_custom_call.1} parent=5 // pred_region
        %s121 = ssub.s32 %s11, 1
        %s122 = smul.u32 4, %s16
        %p123 = scmp.lt.s32.totalorder %s122, 7
        %s124 = scalar_select %p123, %s122, 7
        %s125 = smul.addr %s124, 8
        %s126 = scalar_lea.vmem %s0, %s125
        %p127 = pneg %p37
        %p128 = pneg %p34
        %p129 = pneg %p58
        %p130 = pneg %p55
        %p131 = pneg %p84
        %p132 = pneg %p81
        %s133 = sand.u32 %s71, 1
        %s134 = scalar_lea.sflag [#allocation3], %s133
        %s135 = sand.u32 %s71, 1
        %s136 = smul.addr %s135, 32
        %s137 = scalar_lea.vmem [#allocation2], %s136
        %s138 = smul.u32 4, %s16
        %p139 = scmp.lt.s32.totalorder %s138, 7
        %s140 = scalar_select %p139, %s138, 7
        %s141 = smul.addr %s140, 8
        %s142 = scalar_lea.vmem %s0, %s141
        %s143 = smul.u32 4, %s16
        %s144 = smul.u32 4, %s16
        %v145 = vld [vmem:[%s142] sm:$0xff]
        %v146 = vld [vmem:[%s142 + $0x8] sm:$0xff]
        %v147 = vld [vmem:[%s142 + $0x10] sm:$0xff]
        %v148 = vld [vmem:[%s142 + $0x18] sm:$0xff]
        %v149 = vld [vmem:[%s1] sm:$0xff]
        %v150 = vld [vmem:[%s1 + $0x8] sm:$0xff]
        %v151 = vld [vmem:[%s1 + $0x10] sm:$0xff]
        %v152 = vld [vmem:[%s1 + $0x18] sm:$0xff]
        %vm153 = vcmask 261120
        %v155 = vsel %vm153, %v145, 0
        %v158 = vsel %vm153, %v146, 0
        %v161 = vsel %vm153, %v147, 0
        %v164 = vsel %vm153, %v148, 0
        %166 = vmatpush.msra.mxu0 0.0
        %167 = vmatpush.msra.mxu0 0.0
        %168 = vmatpush.msra.mxu0 0.0
        %169 = vmatpush.msra.mxu0 0.0
        %170 = vmatpush.msra.mxu0 0.0
        %171 = vmatpush.msra.mxu0 0.0
        %172 = vmatpush.msra.mxu0 0.0
        %173 = vmatpush.msra.mxu0 0.0
        %174 = vmatpush.msra.mxu0 0.0
        %175 = vmatpush.msra.mxu0 0.0
        %176 = vmatpush.msra.mxu0 0.0
        %177 = vmatpush.msra.mxu0 0.0
        %178 = vmatpush.msra.mxu0 %v152
        %179 = vmatpush.msra.mxu0 %v151
        %180 = vmatpush.msra.mxu0 %v150
        %181 = vmatpush.msra.mxu0 %v149
        %182 = vmatmul.f32.gmra.mxu0 %v155
        %v183 = vpop.f32.mrf.mxu0
        %v184 = vadd.f32 0.0, %v183
        %185 = vmatmul.f32.gmra.mxu0 %v158
        %v186 = vpop.f32.mrf.mxu0
        %v187 = vadd.f32 0.0, %v186
        %188 = vmatmul.f32.gmra.mxu0 %v161
        %v189 = vpop.f32.mrf.mxu0
        %v190 = vadd.f32 0.0, %v189
        %191 = vmatmul.f32.gmra.mxu0 %v164
        %v192 = vpop.f32.mrf.mxu0
        %v193 = vadd.f32 0.0, %v192
        %194 = vdwg.mxu0
        %195 = vst [vmem:[%s137] sm:$0xff] %v184
        %196 = vst [vmem:[%s137 + $0x8] sm:$0xff] %v187
        %197 = vst [vmem:[%s137 + $0x10] sm:$0xff] %v190
        %198 = vst [vmem:[%s137 + $0x18] sm:$0xff] %v193
        %s199 = sand.u32 %s71, 1
        %s200 = scalar_lea.sflag [#allocation3], %s199
        %s201 = sand.u32 %s71, 1
        %s202 = smul.addr %s201, 32
        %s203 = scalar_lea.vmem [#allocation2], %s202
        // Predicated region
        $region29: #{tpu_custom_call.1} parent=27 // pred_check
          %p204 = pneg %p81
        $region30: #{tpu_custom_call.1} parent=27 // pred_check_branch
          %206 = sbr.rel (%p204) target = $region32
        $region31: #{tpu_custom_call.1} parent=27 // pred_region
          %s207 = smul.u32 4, %s16
          %209 = vsyncadd %s200, 0
          %s210 = smul.addr %s207, 8
          %s211 = scalar_lea.hbm %s2, %s210
          %s212 = sshll.u32 %s203, 4
          %s213 = int_to_ptr.vmem [resolvable:$true] %s212
          %s214 = sshll.u32 %s211, 4
          %s215 = int_to_ptr.hbm [resolvable:$true] %s214
          %220 = dma.vmem_to_hbm [thread:$0]  %s213, 512, %s215, %s200, 128, 128, 8
        $region32: #{tpu_custom_call.1} parent=27 // pred_fallthru
          _
      $region28: #{tpu_custom_call.1} parent=5 // pred_fallthru
        _
      %p221 = scmp.le.s32.totalorder 2, %s11
      // Predicated region
      $region33: #{tpu_custom_call.1} parent=5 // pred_check
        %p222 = pneg %p221
      $region34: #{tpu_custom_call.1} parent=5 // pred_check_branch
        %224 = sbr.rel (%p222) target = $region36
      $region35: #{tpu_custom_call.1} parent=5 // pred_region
        %s225 = ssub.s32 %s11, 2
        // Predicated region
        $region37: #{tpu_custom_call.1} parent=35 // pred_check
          %p226 = pneg %p87
        $region38: #{tpu_custom_call.1} parent=35 // pred_check_branch
          %228 = sbr.rel (%p226) target = $region40
        $region39: #{tpu_custom_call.1} parent=35 // pred_region
          %s229 = sand.u32 %s72, 1
          %s230 = scalar_lea.sflag [#allocation3], %s229
          %s231 = sand.u32 %s72, 1
          %s232 = smul.addr %s231, 32
          %s233 = scalar_lea.vmem [#allocation2], %s232
          %235 = dma.done %s230, 512
        $region40: #{tpu_custom_call.1} parent=35 // pred_fallthru
          _
      $region36: #{tpu_custom_call.1} parent=5 // pred_fallthru
        _
    $region6: #{tpu_custom_call.1} parent=1 // loop_footer
      %s15 = sadd.s32 1, %s11
    $region7: #{tpu_custom_call.1} parent=1 // loop_footer_branch
      %10 = sbr.rel target = $region3
    $region8: #{tpu_custom_call.1} parent=1 // loop_exit
      _
    %236 = vsyncpa [#allocation3], 1
    %s237 = scalar_lea.sflag [#allocation3], 1
    %238 = vsyncpa %s237, 1

</llo_original>
